<compile_context>
chip_gen: v5e
topology: v5e:2x2
jax: 0.10.0
libtpu: 0.0.40
codegen_flags: <defaults>
</compile_context>

<pallas_src>
import functools

import jax
import jax.numpy as jnp
from jax.experimental import pallas as pl
from jax.experimental.pallas import tpu as pltpu


def _round_up(n: int, m: int) -> int:
    return ((n + m - 1) // m) * m


def _cdiv(a: int, b: int) -> int:
    return -(-a // b)


def mlp_kernel(x_ref, w1_ref, b1_ref, w2_ref, b2_ref, o_ref):
    # In-kernel cast of the f32 x tile to bf16 (hidden under the tile DMA).
    x = x_ref[...].astype(w1_ref.dtype)
    # fc1: [TB, D_in](bf16) @ [D_in, H](bf16) -> f32 accumulator on the MXU.
    h = jnp.dot(x, w1_ref[...], preferred_element_type=jnp.float32)
    # Bias + ReLU on the f32 accumulator (v5e has no bf16 VPU; free on v6e/v7x).
    h = jnp.maximum(h + b1_ref[...], 0.0)
    # fc2: single pack back to bf16 for the MXU, accumulate in f32.
    out = jnp.dot(h.astype(w2_ref.dtype), w2_ref[...],
                  preferred_element_type=jnp.float32)
    # Unpadded store: block last dim == full d_out, so no dead writeback bytes.
    o_ref[...] = (out + b2_ref[...]).astype(o_ref.dtype)


def prepare_params(w1, b1, w2, b2, compute_dtype=jnp.bfloat16):
    """One-time parameter prep (do NOT call per forward).

    torch.nn.Linear layout in: w1 [H, D_in], b1 [H], w2 [D_out, H], b2 [D_out].
    Returns kernel-layout tensors: w1_t [D_in, H] bf16, b1 [1, H] f32,
    w2_t [H, D_out] bf16 (unpadded), b2 [1, D_out] f32.
    """
    hidden = w1.shape[0]
    d_out = w2.shape[0]

    w1_t = jnp.asarray(w1, jnp.float32).T.astype(compute_dtype)   # [D_in, H]
    b1_2d = jnp.asarray(b1, jnp.float32).reshape(1, hidden)       # [1, H]
    w2_t = jnp.asarray(w2, jnp.float32).T.astype(compute_dtype)   # [H, D_out]
    b2_2d = jnp.asarray(b2, jnp.float32).reshape(1, d_out)        # [1, D_out]

    return w1_t, b1_2d, w2_t, b2_2d


def _choose_batch_tiling(batch: int, tile_b_max: int) -> tuple[int, int]:
    """Balanced batch tiles: minimal padding, >=2 (even) tiles for v7x megacore."""
    sub = 8  # f32 sublane; x/out VMEM blocks are f32 (bf16 cast is in-register)
    n_tiles = max(1, _cdiv(batch, tile_b_max))
    if batch > 2 * sub:
        n_tiles = max(n_tiles, 2)          # light up v7x's 2nd TensorCore
        if n_tiles % 2:
            n_tiles += 1                   # even step count -> balanced cores
    tile_b = _round_up(_cdiv(batch, n_tiles), sub)
    b_pad = _round_up(batch, tile_b)
    return tile_b, b_pad


@functools.partial(jax.jit, static_argnames=("tile_b_max",))
def bayesian_nn_forward(x, w1_t, b1, w2_t, b2, *, tile_b_max=1024):
    """x: [B, D_in] float32 (no wrapper-side cast). Returns [B, d_out] float32."""
    B, d_in = x.shape
    hidden = w1_t.shape[1]
    d_out = w2_t.shape[1]

    tile_b, b_pad = _choose_batch_tiling(B, tile_b_max)
    if b_pad != B:
        x = jnp.pad(x, ((0, b_pad - B), (0, 0)))

    grid = (b_pad // tile_b,)

    cost = pl.CostEstimate(
        flops=2 * b_pad * (d_in * hidden + hidden * d_out),
        transcendentals=0,
        bytes_accessed=(b_pad * d_in * 4 + b_pad * d_out * 4
                        + w1_t.size * 2 + w2_t.size * 2
                        + b1.size * 4 + b2.size * 4),
    )

    out = pl.pallas_call(
        mlp_kernel,
        out_shape=jax.ShapeDtypeStruct((b_pad, d_out), jnp.float32),
        grid_spec=pltpu.PrefetchScalarGridSpec(
            num_scalar_prefetch=0,
            grid=grid,
            in_specs=[
                pl.BlockSpec((tile_b, d_in), lambda i: (i, 0)),    # x: pipelined tile
                pl.BlockSpec((d_in, hidden), lambda i: (0, 0)),    # w1: VMEM-resident
                pl.BlockSpec((1, hidden), lambda i: (0, 0)),       # b1: VMEM-resident
                pl.BlockSpec((hidden, d_out), lambda i: (0, 0)),   # w2: VMEM-resident
                pl.BlockSpec((1, d_out), lambda i: (0, 0)),        # b2: VMEM-resident
            ],
            out_specs=pl.BlockSpec((tile_b, d_out), lambda i: (i, 0)),
        ),
        compiler_params=pltpu.CompilerParams(
            dimension_semantics=("parallel",),   # batch tiles split across v7x's 2 TCs
        ),
        cost_estimate=cost,
    )(x, w1_t, b1, w2_t, b2)

    # Strip batch padding only (no column padding anymore).
    return out[:B] if b_pad != B else out


def init_linear_params(key, in_features, out_features):
    """Deterministic init mimicking torch.nn.Linear default (uniform +/- 1/sqrt(in))."""
    kw, kb = jax.random.split(key)
    bound = 1.0 / jnp.sqrt(jnp.float32(in_features))
    w = jax.random.uniform(kw, (out_features, in_features), jnp.float32, -bound, bound)
    b = jax.random.uniform(kb, (out_features,), jnp.float32, -bound, bound)
    return w, b


def _reference_bf16(x, w1, b1, w2, b2):
    """Same bf16-input / f32-accumulate recipe as the kernel (tight check)."""
    xb = x.astype(jnp.bfloat16)
    h = jnp.maximum(
        jnp.dot(xb, w1.astype(jnp.bfloat16).T, preferred_element_type=jnp.float32) + b1,
        0.0)
    return jnp.dot(h.astype(jnp.bfloat16), w2.astype(jnp.bfloat16).T,
                   preferred_element_type=jnp.float32) + b2


if __name__ == "__main__":
    # Small shapes consistent with the module: x is [batch, input_dim].
    batch, input_dim, hidden_dim, output_dim = 8, 16, 32, 8

    key = jax.random.PRNGKey(0)
    kx, k1, k2, kx2 = jax.random.split(key, 4)

    x = jax.random.normal(kx, (batch, input_dim), jnp.float32)
    w1, b1 = init_linear_params(k1, input_dim, hidden_dim)   # fc1: Linear(input_dim, hidden_dim)
    w2, b2 = init_linear_params(k2, hidden_dim, output_dim)  # fc2: Linear(hidden_dim, output_dim)

    # One-time parameter prep (transpose / bf16 cast).
    w1_t, b1_2d, w2_t, b2_2d = prepare_params(w1, b1, w2, b2)

    out = bayesian_nn_forward(x, w1_t, b1_2d, w2_t, b2_2d)
    out = jax.block_until_ready(out)
    assert out.shape == (batch, output_dim)

    # Reference 1: bf16/f32-accumulate recipe matching the kernel (tight check).
    ref_bf16 = _reference_bf16(x, w1, b1, w2, b2)
    assert jnp.allclose(out, ref_bf16, atol=1e-3, rtol=1e-3)

    # Reference 2: full-f32 PyTorch-equivalent math (loose sanity check for bf16 error).
    ref_f32 = jnp.maximum(x @ w1.T + b1, 0.0) @ w2.T + b2
    assert jnp.allclose(out, ref_f32, atol=5e-2, rtol=5e-2)

    # Second check: batch not a tile multiple -> exercises multi-tile grid + row padding.
    batch2 = 40
    x2 = jax.random.normal(kx2, (batch2, input_dim), jnp.float32)
    out2 = jax.block_until_ready(bayesian_nn_forward(x2, w1_t, b1_2d, w2_t, b2_2d))
    assert out2.shape == (batch2, output_dim)
    assert jnp.allclose(out2, _reference_bf16(x2, w1, b1, w2, b2), atol=1e-3, rtol=1e-3)

    print("KERNEL_OK")
</pallas_src>

<mosaic_0001>
module attributes {stable_mosaic.version = 11 : i64} {
  func.func @mlp_kernel(%arg0: i32, %arg1: memref<8x16xf32, #tpu.memory_space<vmem>>, %arg2: memref<16x32xbf16, #tpu.memory_space<vmem>>, %arg3: memref<1x32xf32, #tpu.memory_space<vmem>>, %arg4: memref<32x8xbf16, #tpu.memory_space<vmem>>, %arg5: memref<1x8xf32, #tpu.memory_space<vmem>>, %arg6: memref<8x8xf32, #tpu.memory_space<vmem>>) attributes {dimension_semantics = [#tpu.dimension_semantics<parallel>], iteration_bounds = array<i64: 1>, scalar_prefetch = 0 : i64, scratch_operands = 0 : i64, tpu.core_type = #tpu.core_type<tc>, window_params = [{transform_indices = @transform_0, window_bounds = array<i64: 8, 16>}, {pipeline_mode = #tpu.pipeline_mode<synchronous>, transform_indices = @transform_1, window_bounds = array<i64: 16, 32>}, {pipeline_mode = #tpu.pipeline_mode<synchronous>, transform_indices = @transform_2, window_bounds = array<i64: 1, 32>}, {pipeline_mode = #tpu.pipeline_mode<synchronous>, transform_indices = @transform_3, window_bounds = array<i64: 32, 8>}, {pipeline_mode = #tpu.pipeline_mode<synchronous>, transform_indices = @transform_4, window_bounds = array<i64: 1, 8>}, {transform_indices = @transform_5, window_bounds = array<i64: 8, 8>}]} {
    %c0 = arith.constant 0 : index
    %c0_0 = arith.constant 0 : index
    %0 = vector.load %arg1[%c0, %c0_0] : memref<8x16xf32, #tpu.memory_space<vmem>>, vector<8x16xf32>
    %1 = arith.truncf %0 : vector<8x16xf32> to vector<8x16xbf16>
    %c0_1 = arith.constant 0 : index
    %c0_2 = arith.constant 0 : index
    %2 = vector.load %arg2[%c0_1, %c0_2] : memref<16x32xbf16, #tpu.memory_space<vmem>>, vector<16x32xbf16>
    %cst = arith.constant dense<0.000000e+00> : vector<8x32xf32>
    %3 = tpu.matmul %1, %2, %cst {dimension_numbers = #tpu.dot_dimension_numbers<[1], [0], [0], [1], [0, 0, 1, 1], [], []>} : vector<8x16xbf16>, vector<16x32xbf16>, vector<8x32xf32> -> vector<8x32xf32>
    %c0_3 = arith.constant 0 : index
    %c0_4 = arith.constant 0 : index
    %4 = vector.load %arg3[%c0_3, %c0_4] : memref<1x32xf32, #tpu.memory_space<vmem>>, vector<1x32xf32>
    %5 = vector.broadcast %4 : vector<1x32xf32> to vector<8x32xf32>
    %6 = arith.addf %3, %5 : vector<8x32xf32>
    %cst_5 = arith.constant 0.000000e+00 : f32
    %7 = vector.broadcast %cst_5 : f32 to vector<8x32xf32>
    %8 = arith.maximumf %6, %7 : vector<8x32xf32>
    %9 = arith.truncf %8 : vector<8x32xf32> to vector<8x32xbf16>
    %c0_6 = arith.constant 0 : index
    %c0_7 = arith.constant 0 : index
    %10 = vector.load %arg4[%c0_6, %c0_7] : memref<32x8xbf16, #tpu.memory_space<vmem>>, vector<32x8xbf16>
    %cst_8 = arith.constant dense<0.000000e+00> : vector<8x8xf32>
    %11 = tpu.matmul %9, %10, %cst_8 {dimension_numbers = #tpu.dot_dimension_numbers<[1], [0], [0], [1], [0, 0, 1, 1], [], []>} : vector<8x32xbf16>, vector<32x8xbf16>, vector<8x8xf32> -> vector<8x8xf32>
    %c0_9 = arith.constant 0 : index
    %c0_10 = arith.constant 0 : index
    %12 = vector.load %arg5[%c0_9, %c0_10] : memref<1x8xf32, #tpu.memory_space<vmem>>, vector<1x8xf32>
    %13 = vector.broadcast %12 : vector<1x8xf32> to vector<8x8xf32>
    %14 = arith.addf %11, %13 : vector<8x8xf32>
    %c0_11 = arith.constant 0 : index
    %c0_12 = arith.constant 0 : index
    %15 = vector.load %arg6[%c0_11, %c0_12] : memref<8x8xf32, #tpu.memory_space<vmem>>, vector<8x8xf32>
    tpu.vector_store %arg6[%c0_11, %c0_12], %14 {strides = array<i32>} : memref<8x8xf32, #tpu.memory_space<vmem>>, vector<8x8xf32>,
    return
  }
  func.func @transform_0(%arg0: i32) -> (i32, i32) {
    %c0_i32 = arith.constant 0 : i32
    %c0_i32_0 = arith.constant 0 : i32
    return %arg0, %c0_i32 : i32, i32
  }
  func.func @transform_1(%arg0: i32) -> (i32, i32) {
    %c0_i32 = arith.constant 0 : i32
    %c0_i32_0 = arith.constant 0 : i32
    %c0_i32_1 = arith.constant 0 : i32
    return %c0_i32, %c0_i32_0 : i32, i32
  }
  func.func @transform_2(%arg0: i32) -> (i32, i32) {
    %c0_i32 = arith.constant 0 : i32
    %c0_i32_0 = arith.constant 0 : i32
    %c0_i32_1 = arith.constant 0 : i32
    return %c0_i32, %c0_i32_0 : i32, i32
  }
  func.func @transform_3(%arg0: i32) -> (i32, i32) {
    %c0_i32 = arith.constant 0 : i32
    %c0_i32_0 = arith.constant 0 : i32
    %c0_i32_1 = arith.constant 0 : i32
    return %c0_i32, %c0_i32_0 : i32, i32
  }
  func.func @transform_4(%arg0: i32) -> (i32, i32) {
    %c0_i32 = arith.constant 0 : i32
    %c0_i32_0 = arith.constant 0 : i32
    %c0_i32_1 = arith.constant 0 : i32
    return %c0_i32, %c0_i32_0 : i32, i32
  }
  func.func @transform_5(%arg0: i32) -> (i32, i32) {
    %c0_i32 = arith.constant 0 : i32
    %c0_i32_0 = arith.constant 0 : i32
    return %arg0, %c0_i32 : i32, i32
  }
}

</mosaic_0001>

<llo_original>
// kernel: bayesian_nn_forward.1
$region0: #{bayesian_nn_forward.1}
  #allocation0 [shape = 'u32[]', space=smem, size = 0x4, offset = 0x4, fixed_abs, tag = 'smem constant byte address 0x4 - core index']
  #allocation1 [shape = 'u32[72,128]{1,0:T(1,128)}', space=vmem, size = 0x9000, scoped, tag = 'internal scratch']
  %s0 = inlined_call_operand.vmem [shape: f32[8,16], index: 0, kind: input, shape index: {}]
  %s1 = inlined_call_operand.vmem [shape: bf16[16,32], index: 1, kind: input, shape index: {}]
  %s2 = inlined_call_operand.vmem [shape: f32[1,32], index: 2, kind: input, shape index: {}]
  %s3 = inlined_call_operand.vmem [shape: bf16[32,8], index: 3, kind: input, shape index: {}]
  %s4 = inlined_call_operand.vmem [shape: f32[1,8], index: 4, kind: input, shape index: {}]
  %s5 = inlined_call_operand.hbm [shape: f32[8,8], index: 5, kind: output, shape index: {}]
  %s6 = sld [smem:[#allocation0]]
  $region30: #{bayesian_nn_forward.1} parent=0
    _
  %s8 = ssub.s32 1, %s6
  %s9 = scalar_select 0, %s8, %s6
  $region1: #{bayesian_nn_forward.1} parent=0
    #allocation2 [shape = 'u8[4096]{0}', space=vmem, size = 0x1000, scoped, tag = 'output window, operand 0, single buffered']
    #allocation3 [shape = 's32[1]{0}', space=sflag, size = 0x4, scoped, tag = 'scoped memory for bayesian_nn_forward.1']
    %10 = vsyncpa [#allocation3], 0
    // Predicated region
    $region2: #{bayesian_nn_forward.1} parent=1 // pred_check
      _
    $region3: #{bayesian_nn_forward.1} parent=1 // pred_check_branch
      %12 = sbr.rel (0) target = $region5
    $region4: #{bayesian_nn_forward.1} parent=1 // pred_region
      _
    $region5: #{bayesian_nn_forward.1} parent=1 // pred_fallthru
      _
    // Predicated region
    $region6: #{bayesian_nn_forward.1} parent=1 // pred_check
      _
    $region7: #{bayesian_nn_forward.1} parent=1 // pred_check_branch
      %14 = sbr.rel (0) target = $region9
    $region8: #{bayesian_nn_forward.1} parent=1 // pred_region
      _
    $region9: #{bayesian_nn_forward.1} parent=1 // pred_fallthru
      _
    // Predicated region
    $region10: #{bayesian_nn_forward.1} parent=1 // pred_check
      _
    $region11: #{bayesian_nn_forward.1} parent=1 // pred_check_branch
      %16 = sbr.rel (0) target = $region13
    $region12: #{bayesian_nn_forward.1} parent=1 // pred_region
      _
    $region13: #{bayesian_nn_forward.1} parent=1 // pred_fallthru
      _
    // Predicated region
    $region14: #{bayesian_nn_forward.1} parent=1 // pred_check
      _
    $region15: #{bayesian_nn_forward.1} parent=1 // pred_check_branch
      %18 = sbr.rel (0) target = $region17
    $region16: #{bayesian_nn_forward.1} parent=1 // pred_region
      _
    $region17: #{bayesian_nn_forward.1} parent=1 // pred_fallthru
      _
    // Predicated region
    $region18: #{bayesian_nn_forward.1} parent=1 // pred_check
      _
    $region19: #{bayesian_nn_forward.1} parent=1 // pred_check_branch
      %20 = sbr.rel (0) target = $region21
    $region20: #{bayesian_nn_forward.1} parent=1 // pred_region
      _
    $region21: #{bayesian_nn_forward.1} parent=1 // pred_fallthru
      _
    %v22 = vld [vmem:[%s0] sm:$0xff]
    %v23 = vpack.c.bf16 %v22, %v22
    %v24 = vld [vmem:[%s1] sm:$0xf]
    %v25 = vld [vmem:[%s1 + $0x4] sm:$0xf]
    %v26 = vld [vmem:[%s2] sm:$0x1]
    %v28 = vperm.slane %v26, 0
    %v32 = vunpack.c.l.b16 %v24
    %v33 = vunpack.c.l.b16 %v25
    %v34 = vpack.c.b16 %v33, %v32
    %vm36 = vcmask 130048
    %v38 = vsel %vm36, %v23, 0
    %40 = vmatpush.bf16.msra.mxu0 0
    %41 = vmatpush.bf16.msra.mxu0 0
    %42 = vmatpush.bf16.msra.mxu0 0
    %43 = vmatpush.bf16.msra.mxu0 0
    %44 = vmatpush.bf16.msra.mxu0 0
    %45 = vmatpush.bf16.msra.mxu0 0
    %46 = vmatpush.bf16.msra.mxu0 0
    %47 = vmatpush.bf16.msra.mxu0 %v34
    %48 = vmatmul.bf16.gmra.mxu0 %v38
    %v49 = vpop.f32.mrf.mxu0
    %v50 = vadd.f32 %v28, %v49
    %v51 = vpop.f32.mrf.mxu0
    %52 = vdwg.mxu0
    %v53 = vmax.f32 %v50, 0.0
    %v54 = vpack.c.bf16 %v53, %v53
    %v55 = vld [vmem:[%s3] sm:$0xf]
    %v56 = vld [vmem:[%s3 + $0x4] sm:$0xf]
    %v57 = vld [vmem:[%s3 + $0x8] sm:$0xf]
    %v58 = vld [vmem:[%s3 + $0xc] sm:$0xf]
    %v59 = vld [vmem:[%s4] sm:$0x1]
    %v61 = vperm.slane %v59, 0
    %v67 = vunpack.c.l.b16 %v55
    %v68 = vunpack.c.l.b16 %v56
    %v69 = vunpack.c.l.b16 %v57
    %v70 = vunpack.c.l.b16 %v58
    %v71 = vpack.c.b16 %v68, %v67
    %v72 = vpack.c.b16 %v70, %v69
    %vm75 = vcmask 261120
    %v77 = vsel %vm75, %v54, 0
    %79 = vmatpush.bf16.msra.mxu0 0
    %80 = vmatpush.bf16.msra.mxu0 0
    %81 = vmatpush.bf16.msra.mxu0 0
    %82 = vmatpush.bf16.msra.mxu0 0
    %83 = vmatpush.bf16.msra.mxu0 0
    %84 = vmatpush.bf16.msra.mxu0 0
    %85 = vmatpush.bf16.msra.mxu0 %v72
    %86 = vmatpush.bf16.msra.mxu0 %v71
    %87 = vmatmul.bf16.gmra.mxu0 %v77
    %v88 = vpop.f32.mrf.mxu0
    %v89 = vadd.f32 %v61, %v88
    %v90 = vpop.f32.mrf.mxu0
    %91 = vdwg.mxu0
    %vm92 = vcmask 64512
    %93 = vst.msk [vmem:[#allocation2] sm:$0xff] %vm92, %v89
    // Predicated region
    $region22: #{bayesian_nn_forward.1} parent=1 // pred_check
      _
    $region23: #{bayesian_nn_forward.1} parent=1 // pred_check_branch
      %95 = sbr.rel (0) target = $region25
    $region24: #{bayesian_nn_forward.1} parent=1 // pred_region
      %97 = vsyncadd [#allocation3], 0
      %s99 = sshll.u32 [#allocation2], 4
      %s100 = int_to_ptr.vmem [resolvable:$true] %s99
      %s101 = sshll.u32 %s5, 4
      %s102 = int_to_ptr.hbm [resolvable:$true] %s101
      %104 = dma.vmem_to_hbm [thread:$0]  %s100, 128, %s102, [#allocation3]
    $region25: #{bayesian_nn_forward.1} parent=1 // pred_fallthru
      _
    // Predicated region
    $region26: #{bayesian_nn_forward.1} parent=1 // pred_check
      _
    $region27: #{bayesian_nn_forward.1} parent=1 // pred_check_branch
      %106 = sbr.rel (0) target = $region29
    $region28: #{bayesian_nn_forward.1} parent=1 // pred_region
      %108 = dma.done [#allocation3], 128
    $region29: #{bayesian_nn_forward.1} parent=1 // pred_fallthru
      _
    %109 = vsyncpa [#allocation3], 1

</llo_original>
